<compile_context>
chip_gen: v7x
topology: tpu7x:2x2x1
jax: 0.10.0
libtpu: 0.0.40
codegen_flags: <defaults>
</compile_context>

<pallas_src>
import functools

import jax
import jax.numpy as jnp
from jax.experimental import pallas as pl
from jax.experimental.pallas import tpu as pltpu


def _fused_mlp_decoder_kernel(*refs):
    """refs = (x_ref, w0, b0, w1, b1, ..., wN-1, bN-1, o_ref).

    Chained Linear+ReLU stages.  Weights arrive as bf16 full blocks; the
    activation is cast to bf16 only for the MXU matmul, while accumulation,
    bias-add and ReLU stay in f32.
    """
    x_ref = refs[0]
    o_ref = refs[-1]
    wb_refs = refs[1:-1]
    n_layers = len(wb_refs) // 2

    h = x_ref[...]                               # f32 [tb, latent_dim]
    for i in range(n_layers):
        w = wb_refs[2 * i][...]                  # bf16 [Din, Dout]
        b = wb_refs[2 * i + 1][...]              # f32  [1, Dout]
        acc = jnp.dot(h.astype(w.dtype), w,
                      preferred_element_type=jnp.float32)
        h = jnp.maximum(acc + b, 0.0)            # f32 epilogue (VPU-safe on v5e)
    o_ref[...] = h.astype(o_ref.dtype)


def _choose_batch_tile(batch, cap):
    """Largest multiple-of-8 divisor of `batch` that is <= cap and leaves >= 2
    grid steps (keeps both v7x TensorCores busy). Falls back to the full batch
    for tiny / non-multiple-of-8 batches (single full-block, still valid since
    a full-extent block dim is exempt from the (8,128) rule)."""
    if batch % 8 != 0 or batch <= 8:
        return batch
    best = None
    limit = min(cap, batch // 2)
    t = 8
    while t <= limit:
        if batch % t == 0:
            best = t
        t += 8
    return best if best is not None else batch


def mlp_decoder_flat(x, params, *, batch_tile_cap=1024):
    """Fused decoder: y = relu(...relu(relu(x@W0+b0)@W1+b1)...) -> [B, Dout].

    x: [B, latent_dim] f32; params: list of (W:[Din,Dout_i] f32, b:[1,Dout_i] f32).
    """
    B, latent_dim = x.shape
    d_out = params[-1][0].shape[1]

    tb = _choose_batch_tile(B, batch_tile_cap)
    grid = (B // tb,)

    in_specs = [pl.BlockSpec((tb, latent_dim), lambda i: (i, 0))]
    flat_args = [x]
    wb_bytes = 0
    for w, b in params:
        din, dout = w.shape
        # Weights cast to bf16 once here -> halved HBM bytes, native MXU path.
        w_bf16 = w.astype(jnp.bfloat16)
        # Constant index_map -> weights/biases stay VMEM-resident across the
        # batch grid (no re-DMA per step).
        in_specs.append(pl.BlockSpec((din, dout), lambda i: (0, 0)))
        in_specs.append(pl.BlockSpec((1, dout), lambda i: (0, 0)))
        flat_args.extend([w_bf16, b])
        wb_bytes += din * dout * 2 + dout * 4

    # Explicit VMEM budget: double-buffered x/out tiles + (double-buffered)
    # weight blocks + headroom for the in-flight f32 intermediates.
    x_tile_bytes = tb * latent_dim * 4
    out_tile_bytes = tb * d_out * 4
    est = 2 * (x_tile_bytes + out_tile_bytes + wb_bytes) + 3 * out_tile_bytes
    vmem_limit = int(min(48 * 2**20, max(32 * 2**20, 2 * est)))

    # TODO(synk): if prod(output_shape) grows large (real images, Dout in the
    # thousands), tile K/N with an "arbitrary" reduction axis + f32 VMEM
    # accumulator instead of full-block resident weights (each full-block
    # weight is double-buffered; v7x has only 64 MiB VMEM).
    return pl.pallas_call(
        _fused_mlp_decoder_kernel,
        out_shape=jax.ShapeDtypeStruct((B, d_out), jnp.float32),
        grid=grid,
        in_specs=in_specs,
        out_specs=pl.BlockSpec((tb, d_out), lambda i: (i, 0)),
        compiler_params=pltpu.CompilerParams(
            dimension_semantics=("parallel",),      # shard batch across TCs
            vmem_limit_bytes=vmem_limit,
        ),
    )(*flat_args)


def init_mlp_decoder_params(key, layers, latent_dim):
    """Deterministic init mimicking nn.Linear default (uniform ±1/sqrt(fan_in)).

    Decoder stack follows the module: in_dim = latent_dim, then one
    Linear(in_dim, dim) + ReLU for each dim in reversed(layers).
    Weights stored transposed as [in_dim, out_dim]."""
    params = []
    in_dim = latent_dim
    for dim in reversed(layers):
        key, kw, kb = jax.random.split(key, 3)
        bound = 1.0 / (in_dim ** 0.5)
        w = jax.random.uniform(kw, (in_dim, dim), jnp.float32, -bound, bound)
        b = jax.random.uniform(kb, (1, dim), jnp.float32, -bound, bound)
        params.append((w, b))
        in_dim = dim
    return params


@functools.partial(jax.jit, static_argnames=("output_shape",))
def mlp_decoder_forward(x, params, output_shape):
    """MLPDecoder.forward: fused (Linear+ReLU)* then view(B, *output_shape)."""
    h = mlp_decoder_flat(x, params)
    return h.reshape((x.shape[0],) + tuple(output_shape))


def _reference_f32(x, params, output_shape):
    h = x
    for w, b in params:
        h = jnp.maximum(h @ w + b, 0.0)
    return h.reshape((x.shape[0],) + tuple(output_shape))


def _reference_bf16(x, params, output_shape):
    """Mirrors the kernel's mixed precision: bf16 matmul inputs, f32 acc/epilogue."""
    h = x
    for w, b in params:
        acc = jnp.dot(h.astype(jnp.bfloat16), w.astype(jnp.bfloat16),
                      preferred_element_type=jnp.float32)
        h = jnp.maximum(acc + b, 0.0)
    return h.reshape((x.shape[0],) + tuple(output_shape))


if __name__ == "__main__":
    # Small shapes consistent with the module:
    #   output_shape = (3, 8, 16) -> last decoder layer dim = 3*8*16 = 384
    #   layers = [384, 128, 64], latent_dim = 32  (decoder: 32->64->128->384)
    output_shape = (3, 8, 16)
    layers = [384, 128, 64]
    latent_dim = 32

    key = jax.random.PRNGKey(0)
    k_params, k_x1, k_x2 = jax.random.split(key, 3)
    params = init_mlp_decoder_params(k_params, layers, latent_dim)

    # Case 1: tiny batch (single full-batch block; launch-overhead bound).
    batch = 2
    x = jax.random.normal(k_x1, (batch, latent_dim), jnp.float32)
    out = jax.block_until_ready(mlp_decoder_forward(x, params, output_shape))
    assert out.shape == (batch,) + output_shape, out.shape
    assert out.dtype == jnp.float32
    ref_mixed = _reference_bf16(x, params, output_shape)
    ref_full = _reference_f32(x, params, output_shape)
    assert jnp.allclose(out, ref_mixed, atol=2e-3, rtol=2e-3)
    assert jnp.allclose(out, ref_full, atol=8e-2, rtol=8e-2)

    # Case 2: larger batch exercises the batch-tiled "parallel" grid path
    # (B=1024 -> tb=512, 2 grid steps: both v7x TensorCores get work).
    big_batch = 1024
    xb = jax.random.normal(k_x2, (big_batch, latent_dim), jnp.float32)
    outb = jax.block_until_ready(mlp_decoder_forward(xb, params, output_shape))
    assert outb.shape == (big_batch,) + output_shape, outb.shape
    refb_mixed = _reference_bf16(xb, params, output_shape)
    refb_full = _reference_f32(xb, params, output_shape)
    assert jnp.allclose(outb, refb_mixed, atol=2e-3, rtol=2e-3)
    assert jnp.allclose(outb, refb_full, atol=8e-2, rtol=8e-2)

    print("KERNEL_OK")
</pallas_src>

<mosaic_0001>
module attributes {stable_mosaic.version = 11 : i64} {
  func.func @_fused_mlp_decoder_kernel(%arg0: i32, %arg1: memref<2x32xf32, #tpu.memory_space<vmem>>, %arg2: memref<32x64xbf16, #tpu.memory_space<vmem>>, %arg3: memref<1x64xf32, #tpu.memory_space<vmem>>, %arg4: memref<64x128xbf16, #tpu.memory_space<vmem>>, %arg5: memref<1x128xf32, #tpu.memory_space<vmem>>, %arg6: memref<128x384xbf16, #tpu.memory_space<vmem>>, %arg7: memref<1x384xf32, #tpu.memory_space<vmem>>, %arg8: memref<2x384xf32, #tpu.memory_space<vmem>>) attributes {dimension_semantics = [#tpu.dimension_semantics<parallel>], iteration_bounds = array<i64: 1>, scalar_prefetch = 0 : i64, scratch_operands = 0 : i64, tpu.core_type = #tpu.core_type<tc>, window_params = [{transform_indices = @transform_0, window_bounds = array<i64: 2, 32>}, {pipeline_mode = #tpu.pipeline_mode<synchronous>, transform_indices = @transform_1, window_bounds = array<i64: 32, 64>}, {pipeline_mode = #tpu.pipeline_mode<synchronous>, transform_indices = @transform_2, window_bounds = array<i64: 1, 64>}, {pipeline_mode = #tpu.pipeline_mode<synchronous>, transform_indices = @transform_3, window_bounds = array<i64: 64, 128>}, {pipeline_mode = #tpu.pipeline_mode<synchronous>, transform_indices = @transform_4, window_bounds = array<i64: 1, 128>}, {pipeline_mode = #tpu.pipeline_mode<synchronous>, transform_indices = @transform_5, window_bounds = array<i64: 128, 384>}, {pipeline_mode = #tpu.pipeline_mode<synchronous>, transform_indices = @transform_6, window_bounds = array<i64: 1, 384>}, {transform_indices = @transform_7, window_bounds = array<i64: 2, 384>}]} {
    %c0 = arith.constant 0 : index
    %c0_0 = arith.constant 0 : index
    %0 = vector.load %arg1[%c0, %c0_0] : memref<2x32xf32, #tpu.memory_space<vmem>>, vector<2x32xf32>
    %c0_1 = arith.constant 0 : index
    %c0_2 = arith.constant 0 : index
    %1 = vector.load %arg2[%c0_1, %c0_2] : memref<32x64xbf16, #tpu.memory_space<vmem>>, vector<32x64xbf16>
    %c0_3 = arith.constant 0 : index
    %c0_4 = arith.constant 0 : index
    %2 = vector.load %arg3[%c0_3, %c0_4] : memref<1x64xf32, #tpu.memory_space<vmem>>, vector<1x64xf32>
    %3 = arith.truncf %0 : vector<2x32xf32> to vector<2x32xbf16>
    %cst = arith.constant dense<0.000000e+00> : vector<2x64xf32>
    %4 = tpu.matmul %3, %1, %cst {dimension_numbers = #tpu.dot_dimension_numbers<[1], [0], [0], [1], [0, 0, 1, 1], [], []>} : vector<2x32xbf16>, vector<32x64xbf16>, vector<2x64xf32> -> vector<2x64xf32>
    %5 = vector.broadcast %2 : vector<1x64xf32> to vector<2x64xf32>
    %6 = arith.addf %4, %5 : vector<2x64xf32>
    %cst_5 = arith.constant 0.000000e+00 : f32
    %7 = vector.broadcast %cst_5 : f32 to vector<2x64xf32>
    %8 = arith.maximumf %6, %7 : vector<2x64xf32>
    %c0_6 = arith.constant 0 : index
    %c0_7 = arith.constant 0 : index
    %9 = vector.load %arg4[%c0_6, %c0_7] : memref<64x128xbf16, #tpu.memory_space<vmem>>, vector<64x128xbf16>
    %c0_8 = arith.constant 0 : index
    %c0_9 = arith.constant 0 : index
    %10 = vector.load %arg5[%c0_8, %c0_9] : memref<1x128xf32, #tpu.memory_space<vmem>>, vector<1x128xf32>
    %11 = arith.truncf %8 : vector<2x64xf32> to vector<2x64xbf16>
    %cst_10 = arith.constant dense<0.000000e+00> : vector<2x128xf32>
    %12 = tpu.matmul %11, %9, %cst_10 {dimension_numbers = #tpu.dot_dimension_numbers<[1], [0], [0], [1], [0, 0, 1, 1], [], []>} : vector<2x64xbf16>, vector<64x128xbf16>, vector<2x128xf32> -> vector<2x128xf32>
    %13 = vector.broadcast %10 : vector<1x128xf32> to vector<2x128xf32>
    %14 = arith.addf %12, %13 : vector<2x128xf32>
    %cst_11 = arith.constant 0.000000e+00 : f32
    %15 = vector.broadcast %cst_11 : f32 to vector<2x128xf32>
    %16 = arith.maximumf %14, %15 : vector<2x128xf32>
    %c0_12 = arith.constant 0 : index
    %c0_13 = arith.constant 0 : index
    %17 = vector.load %arg6[%c0_12, %c0_13] : memref<128x384xbf16, #tpu.memory_space<vmem>>, vector<128x384xbf16>
    %c0_14 = arith.constant 0 : index
    %c0_15 = arith.constant 0 : index
    %18 = vector.load %arg7[%c0_14, %c0_15] : memref<1x384xf32, #tpu.memory_space<vmem>>, vector<1x384xf32>
    %19 = arith.truncf %16 : vector<2x128xf32> to vector<2x128xbf16>
    %cst_16 = arith.constant dense<0.000000e+00> : vector<2x384xf32>
    %20 = tpu.matmul %19, %17, %cst_16 {dimension_numbers = #tpu.dot_dimension_numbers<[1], [0], [0], [1], [0, 0, 1, 1], [], []>} : vector<2x128xbf16>, vector<128x384xbf16>, vector<2x384xf32> -> vector<2x384xf32>
    %21 = vector.broadcast %18 : vector<1x384xf32> to vector<2x384xf32>
    %22 = arith.addf %20, %21 : vector<2x384xf32>
    %cst_17 = arith.constant 0.000000e+00 : f32
    %23 = vector.broadcast %cst_17 : f32 to vector<2x384xf32>
    %24 = arith.maximumf %22, %23 : vector<2x384xf32>
    %c0_18 = arith.constant 0 : index
    %c0_19 = arith.constant 0 : index
    %25 = vector.load %arg8[%c0_18, %c0_19] : memref<2x384xf32, #tpu.memory_space<vmem>>, vector<2x384xf32>
    tpu.vector_store %arg8[%c0_18, %c0_19], %24 {strides = array<i32>} : memref<2x384xf32, #tpu.memory_space<vmem>>, vector<2x384xf32>,
    return
  }
  func.func @transform_0(%arg0: i32) -> (i32, i32) {
    %c0_i32 = arith.constant 0 : i32
    %c0_i32_0 = arith.constant 0 : i32
    return %arg0, %c0_i32 : i32, i32
  }
  func.func @transform_1(%arg0: i32) -> (i32, i32) {
    %c0_i32 = arith.constant 0 : i32
    %c0_i32_0 = arith.constant 0 : i32
    %c0_i32_1 = arith.constant 0 : i32
    return %c0_i32, %c0_i32_0 : i32, i32
  }
  func.func @transform_2(%arg0: i32) -> (i32, i32) {
    %c0_i32 = arith.constant 0 : i32
    %c0_i32_0 = arith.constant 0 : i32
    %c0_i32_1 = arith.constant 0 : i32
    return %c0_i32, %c0_i32_0 : i32, i32
  }
  func.func @transform_3(%arg0: i32) -> (i32, i32) {
    %c0_i32 = arith.constant 0 : i32
    %c0_i32_0 = arith.constant 0 : i32
    %c0_i32_1 = arith.constant 0 : i32
    return %c0_i32, %c0_i32_0 : i32, i32
  }
  func.func @transform_4(%arg0: i32) -> (i32, i32) {
    %c0_i32 = arith.constant 0 : i32
    %c0_i32_0 = arith.constant 0 : i32
    %c0_i32_1 = arith.constant 0 : i32
    return %c0_i32, %c0_i32_0 : i32, i32
  }
  func.func @transform_5(%arg0: i32) -> (i32, i32) {
    %c0_i32 = arith.constant 0 : i32
    %c0_i32_0 = arith.constant 0 : i32
    %c0_i32_1 = arith.constant 0 : i32
    return %c0_i32, %c0_i32_0 : i32, i32
  }
  func.func @transform_6(%arg0: i32) -> (i32, i32) {
    %c0_i32 = arith.constant 0 : i32
    %c0_i32_0 = arith.constant 0 : i32
    %c0_i32_1 = arith.constant 0 : i32
    return %c0_i32, %c0_i32_0 : i32, i32
  }
  func.func @transform_7(%arg0: i32) -> (i32, i32) {
    %c0_i32 = arith.constant 0 : i32
    %c0_i32_0 = arith.constant 0 : i32
    return %arg0, %c0_i32 : i32, i32
  }
}

</mosaic_0001>

<llo_original>
// kernel: mlp_decoder_forward.1
$region0: #{mlp_decoder_forward.1}
  #allocation0 [shape = 'u32[]', space=smem, size = 0x4, offset = 0x4, fixed_abs, tag = 'smem constant byte address 0x4 - core index']
  #allocation1 [shape = 'u32[144,128]{1,0:T(1,128)}', space=vmem, size = 0x12000, scoped, tag = 'internal scratch']
  %s0 = inlined_call_operand.vmem [shape: f32[2,32], index: 0, kind: input, shape index: {}]
  %s1 = inlined_call_operand.vmem [shape: bf16[32,64], index: 1, kind: input, shape index: {}]
  %s2 = inlined_call_operand.vmem [shape: f32[1,64], index: 2, kind: input, shape index: {}]
  %s3 = inlined_call_operand.vmem [shape: bf16[64,128], index: 3, kind: input, shape index: {}]
  %s4 = inlined_call_operand.vmem [shape: f32[1,128], index: 4, kind: input, shape index: {}]
  %s5 = inlined_call_operand.vmem [shape: bf16[128,384], index: 5, kind: input, shape index: {}]
  %s6 = inlined_call_operand.vmem [shape: f32[1,384], index: 6, kind: input, shape index: {}]
  %s7 = inlined_call_operand.vmem [shape: f32[2,384], index: 7, kind: output, shape index: {}]
  %s8 = sld [smem:[#allocation0]]
  $region38: #{mlp_decoder_forward.1} parent=0
    _
  %s10 = ssub.s32 1, %s8
  %s11 = scalar_select 0, %s10, %s8
  // Predicated region
  $region2: #{mlp_decoder_forward.1} parent=0 // pred_check
    _
  $region3: #{mlp_decoder_forward.1} parent=0 // pred_check_branch
    %13 = sbr.rel (0) target = $region5
  $region4: #{mlp_decoder_forward.1} parent=0 // pred_region
    _
  $region5: #{mlp_decoder_forward.1} parent=0 // pred_fallthru
    _
  // Predicated region
  $region6: #{mlp_decoder_forward.1} parent=0 // pred_check
    _
  $region7: #{mlp_decoder_forward.1} parent=0 // pred_check_branch
    %15 = sbr.rel (0) target = $region9
  $region8: #{mlp_decoder_forward.1} parent=0 // pred_region
    _
  $region9: #{mlp_decoder_forward.1} parent=0 // pred_fallthru
    _
  // Predicated region
  $region10: #{mlp_decoder_forward.1} parent=0 // pred_check
    _
  $region11: #{mlp_decoder_forward.1} parent=0 // pred_check_branch
    %17 = sbr.rel (0) target = $region13
  $region12: #{mlp_decoder_forward.1} parent=0 // pred_region
    _
  $region13: #{mlp_decoder_forward.1} parent=0 // pred_fallthru
    _
  // Predicated region
  $region14: #{mlp_decoder_forward.1} parent=0 // pred_check
    _
  $region15: #{mlp_decoder_forward.1} parent=0 // pred_check_branch
    %19 = sbr.rel (0) target = $region17
  $region16: #{mlp_decoder_forward.1} parent=0 // pred_region
    _
  $region17: #{mlp_decoder_forward.1} parent=0 // pred_fallthru
    _
  // Predicated region
  $region18: #{mlp_decoder_forward.1} parent=0 // pred_check
    _
  $region19: #{mlp_decoder_forward.1} parent=0 // pred_check_branch
    %21 = sbr.rel (0) target = $region21
  $region20: #{mlp_decoder_forward.1} parent=0 // pred_region
    _
  $region21: #{mlp_decoder_forward.1} parent=0 // pred_fallthru
    _
  // Predicated region
  $region22: #{mlp_decoder_forward.1} parent=0 // pred_check
    _
  $region23: #{mlp_decoder_forward.1} parent=0 // pred_check_branch
    %23 = sbr.rel (0) target = $region25
  $region24: #{mlp_decoder_forward.1} parent=0 // pred_region
    _
  $region25: #{mlp_decoder_forward.1} parent=0 // pred_fallthru
    _
  // Predicated region
  $region26: #{mlp_decoder_forward.1} parent=0 // pred_check
    _
  $region27: #{mlp_decoder_forward.1} parent=0 // pred_check_branch
    %25 = sbr.rel (0) target = $region29
  $region28: #{mlp_decoder_forward.1} parent=0 // pred_region
    _
  $region29: #{mlp_decoder_forward.1} parent=0 // pred_fallthru
    _
  %v27 = vld [vmem:[%s0] sm:$0x3]
  %v28 = vld [vmem:[%s1] sm:$0xf]
  %v29 = vld [vmem:[%s1 + $0x4] sm:$0xf]
  %v30 = vld [vmem:[%s1 + $0x8] sm:$0xf]
  %v31 = vld [vmem:[%s1 + $0xc] sm:$0xf]
  %v32 = vld [vmem:[%s2] sm:$0x1]
  %v33 = vpack.c.bf16 %v27, %v27
  %v35 = vlaneseq
  %v36 = vshrl.u32 %v35, 7
  %v37 = vsub.s32 0, %v36
  %v38 = vrot.slane %v32, %v37
  %v44 = vunpack.c.l.b16 %v28
  %v45 = vunpack.c.l.b16 %v29
  %v46 = vunpack.c.l.b16 %v30
  %v47 = vunpack.c.l.b16 %v31
  %v48 = vpack.c.b16 %v45, %v44
  %v49 = vpack.c.b16 %v47, %v46
  %vm52 = vcmask 261120
  %v54 = vsel %vm52, %v33, 0
  %56 = vmatprep.subr.bf16.mxu0 0
  %57 = vmatpush1.bf16.msra.mxu0 %v48
  %58 = vmatprep.subr.bf16.mxu0 0
  %59 = vmatpush1.bf16.msra.mxu0 %v49
  %60 = vmatprep.subr.bf16.mxu0 0
  %61 = vmatpush1.bf16.msra.mxu0 0
  %62 = vmatprep.subr.bf16.mxu0 0
  %63 = vmatpush1.bf16.msra.mxu0 0
  %64 = vmatprep.subr.bf16.mxu0 0
  %65 = vmatpush1.bf16.msra.mxu0 0
  %66 = vmatprep.subr.bf16.mxu0 0
  %67 = vmatpush1.bf16.msra.mxu0 0
  %68 = vmatprep.subr.bf16.mxu0 0
  %69 = vmatpush1.bf16.msra.mxu0 0
  %70 = vmatprep.subr.bf16.mxu0 0
  %71 = vmatpush1.bf16.msra.mxu0 0
  %72 = vmatprep.subr.bf16.mxu0 0
  %73 = vmatpush1.bf16.msra.mxu0 0
  %74 = vmatprep.subr.bf16.mxu0 0
  %75 = vmatpush1.bf16.msra.mxu0 0
  %76 = vmatprep.subr.bf16.mxu0 0
  %77 = vmatpush1.bf16.msra.mxu0 0
  %78 = vmatprep.subr.bf16.mxu0 0
  %79 = vmatpush1.bf16.msra.mxu0 0
  %80 = vmatprep.subr.bf16.mxu0 0
  %81 = vmatpush1.bf16.msra.mxu0 0
  %82 = vmatprep.subr.bf16.mxu0 0
  %83 = vmatpush1.bf16.msra.mxu0 0
  %84 = vmatprep.subr.bf16.mxu0 0
  %85 = vmatpush1.bf16.msra.mxu0 0
  %86 = vmatprep.subr.bf16.mxu0 0
  %87 = vmatpush1.bf16.msra.mxu0 0
  %88 = vmatprep.mubr.bf16.mxu0 0
  %89 = vmatmul.mubr.bf16.gmra.mrb[0].mxu0 %v54
  %v90 = vpop.f32.mrb[0].mxu0
  %v91 = vadd.f32 %v38, %v90
  %v92 = vpop.f32.mrb[0].mxu0
  %v93 = vpop.f32.mrb[0].mxu0
  %v94 = vpop.f32.mrb[0].mxu0
  %95 = vdwg.mxu0
  %v96 = vmax.f32 %v91, 0.0
  %v97 = vld [vmem:[%s3] sm:$0xf]
  %v98 = vld [vmem:[%s3 + $0x4] sm:$0xf]
  %v99 = vld [vmem:[%s3 + $0x8] sm:$0xf]
  %v100 = vld [vmem:[%s3 + $0xc] sm:$0xf]
  %v101 = vld [vmem:[%s3 + $0x10] sm:$0xf]
  %v102 = vld [vmem:[%s3 + $0x14] sm:$0xf]
  %v103 = vld [vmem:[%s3 + $0x18] sm:$0xf]
  %v104 = vld [vmem:[%s3 + $0x1c] sm:$0xf]
  %v105 = vld [vmem:[%s4] sm:$0x1]
  %v106 = vpack.c.bf16 %v96, %v96
  %v108 = vlaneseq
  %v109 = vshrl.u32 %v108, 7
  %v110 = vsub.s32 0, %v109
  %v111 = vrot.slane %v105, %v110
  %v121 = vunpack.c.l.b16 %v97
  %v122 = vunpack.c.l.b16 %v98
  %v123 = vunpack.c.l.b16 %v99
  %v124 = vunpack.c.l.b16 %v100
  %v125 = vunpack.c.l.b16 %v101
  %v126 = vunpack.c.l.b16 %v102
  %v127 = vunpack.c.l.b16 %v103
  %v128 = vunpack.c.l.b16 %v104
  %v129 = vpack.c.b16 %v122, %v121
  %v130 = vpack.c.b16 %v124, %v123
  %v131 = vpack.c.b16 %v126, %v125
  %v132 = vpack.c.b16 %v128, %v127
  %vm137 = vcmask 523264
  %v139 = vsel %vm137, %v106, 0
  %141 = vmatprep.subr.bf16.mxu0 0
  %142 = vmatpush1.bf16.msra.mxu0 %v129
  %143 = vmatprep.subr.bf16.mxu0 0
  %144 = vmatpush1.bf16.msra.mxu0 %v130
  %145 = vmatprep.subr.bf16.mxu0 0
  %146 = vmatpush1.bf16.msra.mxu0 %v131
  %147 = vmatprep.subr.bf16.mxu0 0
  %148 = vmatpush1.bf16.msra.mxu0 %v132
  %149 = vmatprep.subr.bf16.mxu0 0
  %150 = vmatpush1.bf16.msra.mxu0 0
  %151 = vmatprep.subr.bf16.mxu0 0
  %152 = vmatpush1.bf16.msra.mxu0 0
  %153 = vmatprep.subr.bf16.mxu0 0
  %154 = vmatpush1.bf16.msra.mxu0 0
  %155 = vmatprep.subr.bf16.mxu0 0
  %156 = vmatpush1.bf16.msra.mxu0 0
  %157 = vmatprep.subr.bf16.mxu0 0
  %158 = vmatpush1.bf16.msra.mxu0 0
  %159 = vmatprep.subr.bf16.mxu0 0
  %160 = vmatpush1.bf16.msra.mxu0 0
  %161 = vmatprep.subr.bf16.mxu0 0
  %162 = vmatpush1.bf16.msra.mxu0 0
  %163 = vmatprep.subr.bf16.mxu0 0
  %164 = vmatpush1.bf16.msra.mxu0 0
  %165 = vmatprep.subr.bf16.mxu0 0
  %166 = vmatpush1.bf16.msra.mxu0 0
  %167 = vmatprep.subr.bf16.mxu0 0
  %168 = vmatpush1.bf16.msra.mxu0 0
  %169 = vmatprep.subr.bf16.mxu0 0
  %170 = vmatpush1.bf16.msra.mxu0 0
  %171 = vmatprep.subr.bf16.mxu0 0
  %172 = vmatpush1.bf16.msra.mxu0 0
  %173 = vmatprep.mubr.bf16.mxu0 0
  %174 = vmatmul.mubr.bf16.gmra.mrb[0].mxu0 %v139
  %v175 = vpop.f32.mrb[0].mxu0
  %v176 = vadd.f32 %v111, %v175
  %v177 = vpop.f32.mrb[0].mxu0
  %v178 = vpop.f32.mrb[0].mxu0
  %v179 = vpop.f32.mrb[0].mxu0
  %180 = vdwg.mxu0
  %v181 = vmax.f32 %v176, 0.0
  %v182 = vld [vmem:[%s5] sm:$0xff]
  %v183 = vld [vmem:[%s5 + $0x8] sm:$0xf]
  %v184 = vld [vmem:[%s5 + $0xc] sm:$0xff]
  %v185 = vld [vmem:[%s5 + $0x14] sm:$0xf]
  %v186 = vld [vmem:[%s5 + $0x18] sm:$0xff]
  %v187 = vld [vmem:[%s5 + $0x20] sm:$0xf]
  %v188 = vld [vmem:[%s5 + $0x24] sm:$0xff]
  %v189 = vld [vmem:[%s5 + $0x2c] sm:$0xf]
  %v190 = vld [vmem:[%s5 + $0x30] sm:$0xff]
  %v191 = vld [vmem:[%s5 + $0x38] sm:$0xf]
  %v192 = vld [vmem:[%s5 + $0x3c] sm:$0xff]
  %v193 = vld [vmem:[%s5 + $0x44] sm:$0xf]
  %v194 = vld [vmem:[%s5 + $0x48] sm:$0xff]
  %v195 = vld [vmem:[%s5 + $0x50] sm:$0xf]
  %v196 = vld [vmem:[%s5 + $0x54] sm:$0xff]
  %v197 = vld [vmem:[%s5 + $0x5c] sm:$0xf]
  %v198 = vld [vmem:[%s5 + $0x60] sm:$0xff]
  %v199 = vld [vmem:[%s5 + $0x68] sm:$0xf]
  %v200 = vld [vmem:[%s5 + $0x6c] sm:$0xff]
  %v201 = vld [vmem:[%s5 + $0x74] sm:$0xf]
  %v202 = vld [vmem:[%s5 + $0x78] sm:$0xff]
  %v203 = vld [vmem:[%s5 + $0x80] sm:$0xf]
  %v204 = vld [vmem:[%s5 + $0x84] sm:$0xff]
  %v205 = vld [vmem:[%s5 + $0x8c] sm:$0xf]
  %v206 = vld [vmem:[%s5 + $0x90] sm:$0xff]
  %v207 = vld [vmem:[%s5 + $0x98] sm:$0xf]
  %v208 = vld [vmem:[%s5 + $0x9c] sm:$0xff]
  %v209 = vld [vmem:[%s5 + $0xa4] sm:$0xf]
  %v210 = vld [vmem:[%s5 + $0xa8] sm:$0xff]
  %v211 = vld [vmem:[%s5 + $0xb0] sm:$0xf]
  %v212 = vld [vmem:[%s5 + $0xb4] sm:$0xff]
  %v213 = vld [vmem:[%s5 + $0xbc] sm:$0xf]
  %v214 = vld [vmem:[%s6] sm:$0x7]
  %v215 = vpack.c.bf16 %v181, %v181
  %v217 = vlaneseq
  %v218 = vshrl.u32 %v217, 7
  %v219 = vsub.s32 0, %v218
  %v220 = vrot.slane %v214, %v219
  %v221 = vlaneseq
  %v222 = vshrl.u32 %v221, 7
  %v223 = vsub.s32 1, %v222
  %v224 = vrot.slane %v214, %v223
  %v225 = vlaneseq
  %v226 = vshrl.u32 %v225, 7
  %v227 = vsub.s32 2, %v226
  %v228 = vrot.slane %v214, %v227
  %v264 = vunpack.c.l.b16 %v182
  %v265 = vunpack.c.h.b16 %v182
  %v266 = vunpack.c.l.b16 %v183
  %v267 = vunpack.c.l.b16 %v184
  %v268 = vunpack.c.h.b16 %v184
  %v269 = vunpack.c.l.b16 %v185
  %v270 = vunpack.c.l.b16 %v186
  %v271 = vunpack.c.h.b16 %v186
  %v272 = vunpack.c.l.b16 %v187
  %v273 = vunpack.c.l.b16 %v188
  %v274 = vunpack.c.h.b16 %v188
  %v275 = vunpack.c.l.b16 %v189
  %v276 = vunpack.c.l.b16 %v190
  %v277 = vunpack.c.h.b16 %v190
  %v278 = vunpack.c.l.b16 %v191
  %v279 = vunpack.c.l.b16 %v192
  %v280 = vunpack.c.h.b16 %v192
  %v281 = vunpack.c.l.b16 %v193
  %v282 = vunpack.c.l.b16 %v194
  %v283 = vunpack.c.h.b16 %v194
  %v284 = vunpack.c.l.b16 %v195
  %v285 = vunpack.c.l.b16 %v196
  %v286 = vunpack.c.h.b16 %v196
  %v287 = vunpack.c.l.b16 %v197
  %v288 = vunpack.c.l.b16 %v198
  %v289 = vunpack.c.h.b16 %v198
  %v290 = vunpack.c.l.b16 %v199
  %v291 = vunpack.c.l.b16 %v200
  %v292 = vunpack.c.h.b16 %v200
  %v293 = vunpack.c.l.b16 %v201
  %v294 = vunpack.c.l.b16 %v202
  %v295 = vunpack.c.h.b16 %v202
  %v296 = vunpack.c.l.b16 %v203
  %v297 = vunpack.c.l.b16 %v204
  %v298 = vunpack.c.h.b16 %v204
  %v299 = vunpack.c.l.b16 %v205
  %v300 = vunpack.c.l.b16 %v206
  %v301 = vunpack.c.h.b16 %v206
  %v302 = vunpack.c.l.b16 %v207
  %v303 = vunpack.c.l.b16 %v208
  %v304 = vunpack.c.h.b16 %v208
  %v305 = vunpack.c.l.b16 %v209
  %v306 = vunpack.c.l.b16 %v210
  %v307 = vunpack.c.h.b16 %v210
  %v308 = vunpack.c.l.b16 %v211
  %v309 = vunpack.c.l.b16 %v212
  %v310 = vunpack.c.h.b16 %v212
  %v311 = vunpack.c.l.b16 %v213
  %v312 = vpack.c.b16 %v267, %v264
  %v313 = vpack.c.b16 %v268, %v265
  %v314 = vpack.c.b16 %v269, %v266
  %v315 = vpack.c.b16 %v273, %v270
  %v316 = vpack.c.b16 %v274, %v271
  %v317 = vpack.c.b16 %v275, %v272
  %v318 = vpack.c.b16 %v279, %v276
  %v319 = vpack.c.b16 %v280, %v277
  %v320 = vpack.c.b16 %v281, %v278
  %v321 = vpack.c.b16 %v285, %v282
  %v322 = vpack.c.b16 %v286, %v283
  %v323 = vpack.c.b16 %v287, %v284
  %v324 = vpack.c.b16 %v291, %v288
  %v325 = vpack.c.b16 %v292, %v289
  %v326 = vpack.c.b16 %v293, %v290
  %v327 = vpack.c.b16 %v297, %v294
  %v328 = vpack.c.b16 %v298, %v295
  %v329 = vpack.c.b16 %v299, %v296
  %v330 = vpack.c.b16 %v303, %v300
  %v331 = vpack.c.b16 %v304, %v301
  %v332 = vpack.c.b16 %v305, %v302
  %v333 = vpack.c.b16 %v309, %v306
  %v334 = vpack.c.b16 %v310, %v307
  %v335 = vpack.c.b16 %v311, %v308
  %360 = vmatprep.subr.bf16.mxu0 %v313
  %361 = vmatpush1.bf16.msra.mxu0 %v312
  %362 = vmatprep.subr.bf16.mxu0 %v316
  %363 = vmatpush1.bf16.msra.mxu0 %v315
  %364 = vmatprep.subr.bf16.mxu0 %v319
  %365 = vmatpush1.bf16.msra.mxu0 %v318
  %366 = vmatprep.subr.bf16.mxu0 %v322
  %367 = vmatpush1.bf16.msra.mxu0 %v321
  %368 = vmatprep.subr.bf16.mxu0 %v325
  %369 = vmatpush1.bf16.msra.mxu0 %v324
  %370 = vmatprep.subr.bf16.mxu0 %v328
  %371 = vmatpush1.bf16.msra.mxu0 %v327
  %372 = vmatprep.subr.bf16.mxu0 %v331
  %373 = vmatpush1.bf16.msra.mxu0 %v330
  %374 = vmatprep.subr.bf16.mxu0 %v334
  %375 = vmatpush1.bf16.msra.mxu0 %v333
  %376 = vmatprep.subr.bf16.mxu0 0
  %377 = vmatpush1.bf16.msra.mxu0 0
  %378 = vmatprep.subr.bf16.mxu0 0
  %379 = vmatpush1.bf16.msra.mxu0 0
  %380 = vmatprep.subr.bf16.mxu0 0
  %381 = vmatpush1.bf16.msra.mxu0 0
  %382 = vmatprep.subr.bf16.mxu0 0
  %383 = vmatpush1.bf16.msra.mxu0 0
  %384 = vmatprep.subr.bf16.mxu0 0
  %385 = vmatpush1.bf16.msra.mxu0 0
  %386 = vmatprep.subr.bf16.mxu0 0
  %387 = vmatpush1.bf16.msra.mxu0 0
  %388 = vmatprep.subr.bf16.mxu0 0
  %389 = vmatpush1.bf16.msra.mxu0 0
  %390 = vmatprep.subr.bf16.mxu0 0
  %391 = vmatpush1.bf16.msra.mxu0 0
  %392 = vmatprep.mubr.bf16.mxu0 0
  %393 = vmatmul.mubr.bf16.gmra.mrb[0].mxu0 %v215
  %v394 = vpop.f32.mrb[0].mxu0
  %v395 = vadd.f32 %v220, %v394
  %v396 = vpop.f32.mrb[0].mxu0
  %v397 = vadd.f32 %v224, %v396
  %v398 = vpop.f32.mrb[0].mxu0
  %v399 = vpop.f32.mrb[0].mxu0
  %400 = vdwg.mxu0
  %401 = vmatprep.subr.bf16.mxu0 0
  %402 = vmatpush1.bf16.msra.mxu0 %v314
  %403 = vmatprep.subr.bf16.mxu0 0
  %404 = vmatpush1.bf16.msra.mxu0 %v317
  %405 = vmatprep.subr.bf16.mxu0 0
  %406 = vmatpush1.bf16.msra.mxu0 %v320
  %407 = vmatprep.subr.bf16.mxu0 0
  %408 = vmatpush1.bf16.msra.mxu0 %v323
  %409 = vmatprep.subr.bf16.mxu0 0
  %410 = vmatpush1.bf16.msra.mxu0 %v326
  %411 = vmatprep.subr.bf16.mxu0 0
  %412 = vmatpush1.bf16.msra.mxu0 %v329
  %413 = vmatprep.subr.bf16.mxu0 0
  %414 = vmatpush1.bf16.msra.mxu0 %v332
  %415 = vmatprep.subr.bf16.mxu0 0
  %416 = vmatpush1.bf16.msra.mxu0 %v335
  %417 = vmatprep.subr.bf16.mxu0 0
  %418 = vmatpush1.bf16.msra.mxu0 0
  %419 = vmatprep.subr.bf16.mxu0 0
  %420 = vmatpush1.bf16.msra.mxu0 0
  %421 = vmatprep.subr.bf16.mxu0 0
  %422 = vmatpush1.bf16.msra.mxu0 0
  %423 = vmatprep.subr.bf16.mxu0 0
  %424 = vmatpush1.bf16.msra.mxu0 0
  %425 = vmatprep.subr.bf16.mxu0 0
  %426 = vmatpush1.bf16.msra.mxu0 0
  %427 = vmatprep.subr.bf16.mxu0 0
  %428 = vmatpush1.bf16.msra.mxu0 0
  %429 = vmatprep.subr.bf16.mxu0 0
  %430 = vmatpush1.bf16.msra.mxu0 0
  %431 = vmatprep.subr.bf16.mxu0 0
  %432 = vmatpush1.bf16.msra.mxu0 0
  %433 = vmatprep.mubr.bf16.mxu0 0
  %434 = vmatmul.mubr.bf16.gmra.mrb[0].mxu0 %v215
  %v435 = vpop.f32.mrb[0].mxu0
  %v436 = vadd.f32 %v228, %v435
  %v437 = vpop.f32.mrb[0].mxu0
  %v438 = vpop.f32.mrb[0].mxu0
  %v439 = vpop.f32.mrb[0].mxu0
  %440 = vdwg.mxu0
  %v441 = vmax.f32 %v395, 0.0
  %v442 = vmax.f32 %v397, 0.0
  %v443 = vmax.f32 %v436, 0.0
  %v447 = vcombine.low %v441, %v442
  %v449 = vunpack.c.l.s4 1983009808
  %v450 = vunpack.c.0.s8 %v449
  %v451 = vlaneseq
  %v452 = vshrl.u32 %v451, 7
  %v453 = vsub.s32 %v450, %v452
  %v454 = vrot.slane %v447, %v453
  %v456 = vunpack.c.l.s4 1983009808
  %v457 = vunpack.c.0.s8 %v456
  %v458 = vlaneseq
  %v459 = vshrl.u32 %v458, 7
  %v460 = vsub.s32 %v457, %v459
  %v461 = vrot.slane %v443, %v460
  %v462 = vcombine.low %v454, %v461
  %464 = vst [vmem:[%s7] sm:$0x3f] %v462
  // Predicated region
  $region30: #{mlp_decoder_forward.1} parent=0 // pred_check
    _
  $region31: #{mlp_decoder_forward.1} parent=0 // pred_check_branch
    %466 = sbr.rel (0) target = $region33
  $region32: #{mlp_decoder_forward.1} parent=0 // pred_region
    _
  $region33: #{mlp_decoder_forward.1} parent=0 // pred_fallthru
    _
  // Predicated region
  $region34: #{mlp_decoder_forward.1} parent=0 // pred_check
    _
  $region35: #{mlp_decoder_forward.1} parent=0 // pred_check_branch
    %468 = sbr.rel (0) target = $region37
  $region36: #{mlp_decoder_forward.1} parent=0 // pred_region
    _
  $region37: #{mlp_decoder_forward.1} parent=0 // pred_fallthru
    _

</llo_original>
